<compile_context>
chip_gen: v7x
topology: tpu7x:2x2x1
jax: 0.10.0
libtpu: 0.0.40
codegen_flags: <defaults>
</compile_context>

<pallas_src>
import jax
import jax.numpy as jnp
from jax.experimental import pallas as pl
from jax.experimental.pallas import tpu as pltpu


_SQRT_2_OVER_PI = 0.7978845608028654
_INV_SQRT_2 = 0.7071067811865476


def _gelu_f32(y, approximate):
    """GELU on f32 values; matches torch.nn.functional.gelu semantics."""
    if approximate == "tanh":
        inner = _SQRT_2_OVER_PI * (y + 0.044715 * (y * y * y))
        return 0.5 * y * (1.0 + jnp.tanh(inner))
    # exact GELU: 0.5 * y * (1 + erf(y / sqrt(2)))
    # erf via Abramowitz & Stegun 7.1.26 (|err| < 1.5e-7); reciprocal on the EUP
    # (pl.reciprocal approx) refined with one Newton step -> ~f32 accuracy.
    x = y * _INV_SQRT_2
    ax = jnp.abs(x)
    d = 1.0 + 0.3275911 * ax
    r = pl.reciprocal(d, approx=True)
    t = r * (2.0 - d * r)                      # one Newton refinement
    poly = t * (0.254829592
                + t * (-0.284496736
                       + t * (1.421413741
                              + t * (-1.453152027 + t * 1.061405429))))
    erf_abs = 1.0 - poly * jnp.exp(-(ax * ax))
    erf = jnp.where(x >= 0.0, erf_abs, -erf_abs)
    return 0.5 * y * (1.0 + erf)


def _make_kernel(approximate, has_bias, k_steps):
    """Build the kernel body for a given static configuration.

    Ref order: x, w, [bias], out, [acc scratch (only when k_steps > 1)].
    """

    def kernel(*refs):
        refs = list(refs)
        x_ref = refs.pop(0)
        w_ref = refs.pop(0)
        b_ref = refs.pop(0) if has_bias else None
        o_ref = refs.pop(0)
        acc_ref = refs.pop(0) if k_steps > 1 else None

        def epilogue(y_f32):
            if has_bias:
                y_f32 = y_f32 + b_ref[...].astype(jnp.float32)
            o_ref[...] = _gelu_f32(y_f32, approximate).astype(o_ref.dtype)

        if k_steps == 1:
            # Single K step: no VMEM accumulator round-trip, no pl.when branches.
            y = jnp.dot(x_ref[...], w_ref[...], preferred_element_type=jnp.float32)
            epilogue(y)
            return

        k = pl.program_id(2)

        @pl.when(k == 0)
        def _():
            acc_ref[...] = jnp.zeros_like(acc_ref)

        acc_ref[...] += jnp.dot(x_ref[...], w_ref[...],
                                preferred_element_type=jnp.float32)

        @pl.when(k == k_steps - 1)
        def _():
            epilogue(acc_ref[...])

    return kernel


def _round_up(a, b):
    return (a + b - 1) // b * b


def _vmem_limit_bytes():
    """Generation-aware VMEM cap: ~96 MiB on v5e/v6e (128 MiB), ~48 MiB on v7x (64 MiB)."""
    try:
        cap = int(pltpu.get_tpu_info().vmem_capacity_bytes)
    except Exception:
        cap = 64 * 1024 * 1024      # conservative (v7x per-TC size)
    return min((cap * 3) // 4, 100 * 1024 * 1024)


def _tensorcores_per_chip():
    try:
        kind = jax.devices()[0].device_kind.lower()
    except Exception:
        return 1
    return 2 if ("v7" in kind or "7x" in kind) else 1


def _footprint_bytes(tm, tn, tk, k_steps, in_itemsize, out_itemsize, has_bias):
    f = 2 * (tm * tk + tk * tn) * in_itemsize     # x + w tiles (double-buffered)
    f += 2 * tm * tn * out_itemsize               # output tile (double-buffered)
    if has_bias:
        f += 2 * tn * in_itemsize
    if k_steps > 1:
        f += tm * tn * 4                          # f32 accumulator scratch
    return f


def _select_tiles(M, K, N, in_itemsize, out_itemsize, has_bias, budget):
    # Lane-dense N tile (N is already >= 128 here: narrow outputs are padded by the caller).
    if N >= 512:
        tn = 512
    elif N >= 256:
        tn = 256
    else:
        tn = N                                    # 128 <= N < 256: full-dim block (legal layout)
    tm = min(512, _round_up(M, 8))
    # K tile must divide K exactly (no masked garbage in the reduction) and be
    # 128-aligned (or the full K). Prefer the full contraction dim.
    k_cands = [K] + [c for c in (2048, 1024, 512, 256, 128) if c < K and K % c == 0]

    while True:
        for tk in k_cands:
            if _footprint_bytes(tm, tn, tk, K // tk,
                                in_itemsize, out_itemsize, has_bias) <= budget:
                return tm, tn, tk
        if tm > 64:
            tm = max(64, tm // 2)
        elif tn > 128 and tn % 128 == 0:
            tn //= 2
        else:
            return tm, tn, k_cands[-1]


def linear_gelu_pallas(x, weight, bias=None, approximate="none",
                       *, tm=None, tn=None, tk=None, matmul_in_bf16=False):
    """x: (..., dim_in); weight: (dim_out, dim_in) [torch layout]; bias: (dim_out,) or None."""
    *lead, dim_in = x.shape
    dim_out, w_in = weight.shape
    assert w_in == dim_in, (w_in, dim_in)

    out_dtype = x.dtype
    x2 = x.reshape(-1, dim_in)
    M = x2.shape[0]
    has_bias = bias is not None

    # Pre-transpose the weight once in the wrapper (one-time HBM op, amortized) so the
    # kernel runs a standard K-contracting MXU matmul with no per-tile transpose.
    wt = weight.T                                  # (dim_in, dim_out)

    # Lane-dense output: pad narrow projections up to 128 lanes (zeros) so stores are
    # unmasked full-lane vst; GELU(0) = 0 in the padded lanes, sliced off below.
    N = 128 if dim_out < 128 else dim_out
    if N != dim_out:
        wt = jnp.pad(wt, ((0, 0), (0, N - dim_out)))

    if has_bias:
        b2 = bias.reshape(1, dim_out).astype(out_dtype)
        if N != dim_out:
            b2 = jnp.pad(b2, ((0, 0), (0, N - dim_out)))

    if matmul_in_bf16:
        # f32 accumulation + f32 GELU epilogue are preserved; only the matmul operands
        # (and their HBM traffic) drop to bf16.
        x2 = x2.astype(jnp.bfloat16)
        wt = wt.astype(jnp.bfloat16)

    in_itemsize = jnp.dtype(x2.dtype).itemsize
    out_itemsize = jnp.dtype(out_dtype).itemsize

    vmem_limit = _vmem_limit_bytes()
    budget = int(vmem_limit * 0.85)

    a_tm, a_tn, a_tk = _select_tiles(M, dim_in, N, in_itemsize, out_itemsize,
                                     has_bias, budget)
    tm_user = tm
    tm = a_tm if tm is None else tm
    tn = a_tn if tn is None else tn
    tk = a_tk if tk is None else tk
    assert dim_in % tk == 0, "K tile must evenly divide dim_in"

    # v7x (2 TensorCores): make sure the 'parallel' M/N axes have >= 2 tiles of work.
    if tm_user is None and _tensorcores_per_chip() >= 2:
        if (-(-M // tm)) * (-(-N // tn)) < 2 and M > 8:
            tm = max(8, _round_up(-(-M // 2), 8))

    grid_m = -(-M // tm)
    grid_n = -(-N // tn)
    k_steps = dim_in // tk
    grid = (grid_m, grid_n, k_steps)

    in_specs = [
        pl.BlockSpec((tm, tk), lambda i, j, k: (i, k)),   # x tile
        pl.BlockSpec((tk, tn), lambda i, j, k: (k, j)),   # weight tile (pre-transposed)
    ]
    inputs = [x2, wt]
    if has_bias:
        in_specs.append(pl.BlockSpec((1, tn), lambda i, j, k: (0, j)))
        inputs.append(b2)

    scratch_shapes = [pltpu.VMEM((tm, tn), jnp.float32)] if k_steps > 1 else []

    bias_bytes = (N * out_itemsize) if has_bias else 0
    cost = pl.CostEstimate(
        flops=2 * M * dim_in * dim_out,
        transcendentals=M * dim_out,
        # Reflect actual re-streaming: weight is read grid_m times, x grid_n times.
        bytes_accessed=(x2.size * grid_n * in_itemsize
                        + wt.size * grid_m * in_itemsize
                        + bias_bytes
                        + M * N * out_itemsize),
    )

    out2 = pl.pallas_call(
        _make_kernel(approximate, has_bias, k_steps),
        out_shape=jax.ShapeDtypeStruct((M, N), out_dtype),
        grid_spec=pltpu.PrefetchScalarGridSpec(
            num_scalar_prefetch=0,
            grid=grid,
            in_specs=in_specs,
            out_specs=pl.BlockSpec((tm, tn), lambda i, j, k: (i, j)),
            scratch_shapes=scratch_shapes,
        ),
        compiler_params=pltpu.CompilerParams(
            dimension_semantics=("parallel", "parallel", "arbitrary"),
            vmem_limit_bytes=vmem_limit,
        ),
        cost_estimate=cost,
    )(*inputs)

    if N != dim_out:
        out2 = out2[:, :dim_out]
    return out2.reshape(*lead, dim_out)


def linear_gelu_reference(x, weight, bias, approximate="none"):
    y = jnp.einsum("...i,oi->...o", x, weight)
    if bias is not None:
        y = y + bias
    return jax.nn.gelu(y, approximate=(approximate == "tanh"))


if __name__ == "__main__":
    key = jax.random.PRNGKey(0)

    # Case 1: the module's toy shape. dim_out < 128 exercises the lane-padding path;
    # tk = dim_in collapses K to a single step (no accumulator scratch).
    batch, seq, dim_in, dim_out = 2, 8, 32, 32
    k_x, k_w, k_b = jax.random.split(key, 3)
    x = jax.random.normal(k_x, (batch, seq, dim_in), dtype=jnp.float32)
    weight = jax.random.normal(k_w, (dim_out, dim_in), dtype=jnp.float32) * 0.05
    bias = jax.random.normal(k_b, (dim_out,), dtype=jnp.float32) * 0.05

    for approximate in ("none", "tanh"):        # module default is 'none' (exact GELU)
        out = linear_gelu_pallas(x, weight, bias, approximate=approximate)
        jax.block_until_ready(out)
        ref = linear_gelu_reference(x, weight, bias, approximate=approximate)
        assert out.shape == (batch, seq, dim_out)
        assert jnp.allclose(out, ref, atol=2e-5, rtol=2e-5), f"mismatch ({approximate})"

    # Case 2: exercise the multi-K accumulator path (tk forced to 128 -> 2 K steps),
    # a full-dim (non-multiple-of-128) N tile, and the no-bias variant.
    dim_in2, dim_out2 = 256, 192
    k_x2, k_w2 = jax.random.split(k_x, 2)
    x_b = jax.random.normal(k_x2, (batch, seq, dim_in2), dtype=jnp.float32)
    w_b = jax.random.normal(k_w2, (dim_out2, dim_in2), dtype=jnp.float32) * 0.03
    for approximate in ("none", "tanh"):
        out = linear_gelu_pallas(x_b, w_b, None, approximate=approximate, tk=128)
        jax.block_until_ready(out)
        ref = linear_gelu_reference(x_b, w_b, None, approximate=approximate)
        assert out.shape == (batch, seq, dim_out2)
        # slightly looser: reduction-order differences in the larger contraction
        assert jnp.allclose(out, ref, atol=1e-4, rtol=1e-4), f"mismatch no-bias ({approximate})"

    print("KERNEL_OK")
</pallas_src>

<mosaic_0001>
module attributes {stable_mosaic.version = 11 : i64} {
  func.func @kernel(%arg0: i32, %arg1: i32, %arg2: i32, %arg3: memref<16x32xf32, #tpu.memory_space<vmem>>, %arg4: memref<32x128xf32, #tpu.memory_space<vmem>>, %arg5: memref<1x128xf32, #tpu.memory_space<vmem>>, %arg6: memref<16x128xf32, #tpu.memory_space<vmem>>) attributes {dimension_semantics = [#tpu.dimension_semantics<parallel>, #tpu.dimension_semantics<parallel>, #tpu.dimension_semantics<arbitrary>], iteration_bounds = array<i64: 1, 1, 1>, scalar_prefetch = 0 : i64, scratch_operands = 0 : i64, tpu.core_type = #tpu.core_type<tc>, window_params = [{transform_indices = @transform_0, window_bounds = array<i64: 16, 32>}, {transform_indices = @transform_1, window_bounds = array<i64: 32, 128>}, {transform_indices = @transform_2, window_bounds = array<i64: 1, 128>}, {transform_indices = @transform_3, window_bounds = array<i64: 16, 128>}]} {
    %c0 = arith.constant 0 : index
    %c0_0 = arith.constant 0 : index
    %0 = vector.load %arg3[%c0, %c0_0] : memref<16x32xf32, #tpu.memory_space<vmem>>, vector<16x32xf32>
    %c0_1 = arith.constant 0 : index
    %c0_2 = arith.constant 0 : index
    %1 = vector.load %arg4[%c0_1, %c0_2] : memref<32x128xf32, #tpu.memory_space<vmem>>, vector<32x128xf32>
    %cst = arith.constant dense<0.000000e+00> : vector<16x128xf32>
    %2 = tpu.matmul %0, %1, %cst {dimension_numbers = #tpu.dot_dimension_numbers<[1], [0], [0], [1], [0, 0, 1, 1], [], []>} : vector<16x32xf32>, vector<32x128xf32>, vector<16x128xf32> -> vector<16x128xf32>
    %c0_3 = arith.constant 0 : index
    %c0_4 = arith.constant 0 : index
    %3 = vector.load %arg5[%c0_3, %c0_4] : memref<1x128xf32, #tpu.memory_space<vmem>>, vector<1x128xf32>
    %4 = vector.broadcast %3 : vector<1x128xf32> to vector<16x128xf32>
    %5 = arith.addf %2, %4 : vector<16x128xf32>
    %cst_5 = arith.constant 0.707106769 : f32
    %6 = vector.broadcast %cst_5 : f32 to vector<16x128xf32>
    %7 = arith.mulf %5, %6 : vector<16x128xf32>
    %8 = math.absf %7 : vector<16x128xf32>
    %cst_6 = arith.constant 0.327591091 : f32
    %9 = vector.broadcast %cst_6 : f32 to vector<16x128xf32>
    %10 = arith.mulf %9, %8 : vector<16x128xf32>
    %cst_7 = arith.constant 1.000000e+00 : f32
    %11 = vector.broadcast %cst_7 : f32 to vector<16x128xf32>
    %12 = arith.addf %11, %10 : vector<16x128xf32>
    %13 = tpu.reciprocal %12 {approx = true} : vector<16x128xf32> -> vector<16x128xf32>
    %14 = arith.mulf %12, %13 : vector<16x128xf32>
    %cst_8 = arith.constant 2.000000e+00 : f32
    %15 = vector.broadcast %cst_8 : f32 to vector<16x128xf32>
    %16 = arith.subf %15, %14 : vector<16x128xf32>
    %17 = arith.mulf %13, %16 : vector<16x128xf32>
    %cst_9 = arith.constant 1.06140542 : f32
    %18 = vector.broadcast %cst_9 : f32 to vector<16x128xf32>
    %19 = arith.mulf %17, %18 : vector<16x128xf32>
    %cst_10 = arith.constant -1.45315206 : f32
    %20 = vector.broadcast %cst_10 : f32 to vector<16x128xf32>
    %21 = arith.addf %20, %19 : vector<16x128xf32>
    %22 = arith.mulf %17, %21 : vector<16x128xf32>
    %cst_11 = arith.constant 1.42141378 : f32
    %23 = vector.broadcast %cst_11 : f32 to vector<16x128xf32>
    %24 = arith.addf %23, %22 : vector<16x128xf32>
    %25 = arith.mulf %17, %24 : vector<16x128xf32>
    %cst_12 = arith.constant -0.284496725 : f32
    %26 = vector.broadcast %cst_12 : f32 to vector<16x128xf32>
    %27 = arith.addf %26, %25 : vector<16x128xf32>
    %28 = arith.mulf %17, %27 : vector<16x128xf32>
    %cst_13 = arith.constant 0.254829586 : f32
    %29 = vector.broadcast %cst_13 : f32 to vector<16x128xf32>
    %30 = arith.addf %29, %28 : vector<16x128xf32>
    %31 = arith.mulf %17, %30 : vector<16x128xf32>
    %32 = arith.mulf %8, %8 : vector<16x128xf32>
    %cst_14 = arith.constant 0.000000e+00 : f32
    %33 = vector.broadcast %cst_14 : f32 to vector<16x128xf32>
    %34 = arith.subf %33, %32 : vector<16x128xf32>
    %35 = math.exp %34 : vector<16x128xf32>
    %36 = arith.mulf %31, %35 : vector<16x128xf32>
    %cst_15 = arith.constant 1.000000e+00 : f32
    %37 = vector.broadcast %cst_15 : f32 to vector<16x128xf32>
    %38 = arith.subf %37, %36 : vector<16x128xf32>
    %cst_16 = arith.constant 0.000000e+00 : f32
    %39 = vector.broadcast %cst_16 : f32 to vector<16x128xf32>
    %40 = arith.cmpf oge, %7, %39 : vector<16x128xf32>
    %cst_17 = arith.constant 0.000000e+00 : f32
    %41 = vector.broadcast %cst_17 : f32 to vector<16x128xf32>
    %42 = arith.subf %41, %38 : vector<16x128xf32>
    %43 = arith.select %40, %38, %42 : vector<16x128xi1>, vector<16x128xf32>
    %cst_18 = arith.constant 5.000000e-01 : f32
    %44 = vector.broadcast %cst_18 : f32 to vector<16x128xf32>
    %45 = arith.mulf %44, %5 : vector<16x128xf32>
    %cst_19 = arith.constant 1.000000e+00 : f32
    %46 = vector.broadcast %cst_19 : f32 to vector<16x128xf32>
    %47 = arith.addf %46, %43 : vector<16x128xf32>
    %48 = arith.mulf %45, %47 : vector<16x128xf32>
    %c0_20 = arith.constant 0 : index
    %c0_21 = arith.constant 0 : index
    %49 = vector.load %arg6[%c0_20, %c0_21] : memref<16x128xf32, #tpu.memory_space<vmem>>, vector<16x128xf32>
    tpu.vector_store %arg6[%c0_20, %c0_21], %48 {strides = array<i32>} : memref<16x128xf32, #tpu.memory_space<vmem>>, vector<16x128xf32>,
    return
  }
  func.func @transform_0(%arg0: i32, %arg1: i32, %arg2: i32) -> (i32, i32) {
    %c0_i32 = arith.constant 0 : i32
    return %arg0, %arg2 : i32, i32
  }
  func.func @transform_1(%arg0: i32, %arg1: i32, %arg2: i32) -> (i32, i32) {
    %c0_i32 = arith.constant 0 : i32
    return %arg2, %arg1 : i32, i32
  }
  func.func @transform_2(%arg0: i32, %arg1: i32, %arg2: i32) -> (i32, i32) {
    %c0_i32 = arith.constant 0 : i32
    %c0_i32_0 = arith.constant 0 : i32
    return %c0_i32, %arg1 : i32, i32
  }
  func.func @transform_3(%arg0: i32, %arg1: i32, %arg2: i32) -> (i32, i32) {
    %c0_i32 = arith.constant 0 : i32
    return %arg0, %arg1 : i32, i32
  }
}

</mosaic_0001>

<llo_original>
// kernel: tpu_custom_call.1
$region0: #{tpu_custom_call.1}
  #allocation0 [shape = 'u32[]', space=smem, size = 0x4, offset = 0x4, fixed_abs, tag = 'smem constant byte address 0x4 - core index']
  #allocation1 [shape = 'u32[144,128]{1,0:T(1,128)}', space=vmem, size = 0x12000, scoped, tag = 'internal scratch']
  %s0 = inlined_call_operand.hbm [shape: f32[16,32], index: 0, kind: input, shape index: {}]
  %s1 = inlined_call_operand.hbm [shape: f32[32,128], index: 1, kind: input, shape index: {}]
  %s2 = inlined_call_operand.vmem [shape: f32[1,128], index: 2, kind: input, shape index: {}]
  %s3 = inlined_call_operand.hbm [shape: f32[16,128], index: 3, kind: output, shape index: {}]
  %s4 = sld [smem:[#allocation0]]
  $region30: #{tpu_custom_call.1} parent=0
    _
  %s6 = ssub.s32 1, %s4
  %s7 = scalar_select 0, %s6, %s4
  $region1: #{tpu_custom_call.1} parent=0
    #allocation2 [shape = 'u8[8192]{0}', space=vmem, size = 0x2000, scoped, tag = 'input window, operand 0, single buffered']
    #allocation3 [shape = 's32[1]{0}', space=sflag, size = 0x4, scoped, tag = 'scoped memory for tpu_custom_call.1']
    #allocation4 [shape = 's32[1]{0}', space=sflag, size = 0x4, scoped, tag = 'scoped memory for tpu_custom_call.1']
    #allocation5 [shape = 'u8[16384]{0}', space=vmem, size = 0x4000, scoped, tag = 'input window, operand 1, single buffered']
    #allocation6 [shape = 's32[1]{0}', space=sflag, size = 0x4, scoped, tag = 'scoped memory for tpu_custom_call.1']
    #allocation7 [shape = 'u8[8192]{0}', space=vmem, size = 0x2000, scoped, tag = 'output window, operand 0, single buffered']
    %8 = vsyncpa [#allocation3], 0
    %9 = vsyncpa [#allocation6], 0
    %10 = vsyncpa [#allocation4], 0
    // Predicated region
    $region2: #{tpu_custom_call.1} parent=1 // pred_check
      _
    $region3: #{tpu_custom_call.1} parent=1 // pred_check_branch
      %12 = sbr.rel (0) target = $region5
    $region4: #{tpu_custom_call.1} parent=1 // pred_region
      %s14 = ssub.s32 256, 256
      %15 = vsyncadd [#allocation3], %s14
      %s16 = sshll.u32 [#allocation2], 4
      %s17 = int_to_ptr.vmem [resolvable:$true] %s16
      %22 = dma.hbm_to_vmem [thread:$0]  %s0, 256, %s17, [#allocation3], 128, 128, 8
    $region5: #{tpu_custom_call.1} parent=1 // pred_fallthru
      _
    // Predicated region
    $region6: #{tpu_custom_call.1} parent=1 // pred_check
      _
    $region7: #{tpu_custom_call.1} parent=1 // pred_check_branch
      %24 = sbr.rel (0) target = $region9
    $region8: #{tpu_custom_call.1} parent=1 // pred_region
      %s26 = ssub.s32 512, 512
      %27 = vsyncadd [#allocation6], %s26
      %s28 = sshll.u32 [#allocation5], 4
      %s29 = int_to_ptr.vmem [resolvable:$true] %s28
      %34 = dma.hbm_to_vmem [thread:$0]  %s1, 512, %s29, [#allocation6], 128, 128, 8
    $region9: #{tpu_custom_call.1} parent=1 // pred_fallthru
      _
    // Predicated region
    $region10: #{tpu_custom_call.1} parent=1 // pred_check
      _
    $region11: #{tpu_custom_call.1} parent=1 // pred_check_branch
      %36 = sbr.rel (0) target = $region13
    $region12: #{tpu_custom_call.1} parent=1 // pred_region
      _
    $region13: #{tpu_custom_call.1} parent=1 // pred_fallthru
      _
    // Predicated region
    $region14: #{tpu_custom_call.1} parent=1 // pred_check
      _
    $region15: #{tpu_custom_call.1} parent=1 // pred_check_branch
      %38 = sbr.rel (0) target = $region17
    $region16: #{tpu_custom_call.1} parent=1 // pred_region
      %39 = dma.done [#allocation3], 256
    $region17: #{tpu_custom_call.1} parent=1 // pred_fallthru
      _
    // Predicated region
    $region18: #{tpu_custom_call.1} parent=1 // pred_check
      _
    $region19: #{tpu_custom_call.1} parent=1 // pred_check_branch
      %41 = sbr.rel (0) target = $region21
    $region20: #{tpu_custom_call.1} parent=1 // pred_region
      %42 = dma.done [#allocation6], 512
    $region21: #{tpu_custom_call.1} parent=1 // pred_fallthru
      _
    %v43 = vld [vmem:[#allocation2] sm:$0xff]
    %v44 = vld [vmem:[#allocation2 + $0x8] sm:$0xff]
    %v45 = vld [vmem:[#allocation5] sm:$0xff]
    %v46 = vld [vmem:[#allocation5 + $0x8] sm:$0xff]
    %v47 = vld [vmem:[#allocation5 + $0x10] sm:$0xff]
    %v48 = vld [vmem:[#allocation5 + $0x18] sm:$0xff]
    %v49 = vld [vmem:[%s2] sm:$0x1]
    %v51 = vlaneseq
    %v52 = vshrl.u32 %v51, 7
    %v53 = vsub.s32 0, %v52
    %v54 = vrot.slane %v49, %v53
    %vm56 = vcmask 261120
    %v58 = vsel %vm56, %v43, 0
    %v61 = vsel %vm56, %v44, 0
    %63 = vmatprep.subr.mxu0 0.0
    %64 = vmatpush1.msra.mxu0 %v45
    %65 = vmatprep.subr.mxu0 0.0
    %66 = vmatpush1.msra.mxu0 %v46
    %67 = vmatprep.subr.mxu0 0.0
    %68 = vmatpush1.msra.mxu0 %v47
    %69 = vmatprep.subr.mxu0 0.0
    %70 = vmatpush1.msra.mxu0 %v48
    %71 = vmatprep.subr.mxu0 0.0
    %72 = vmatpush1.msra.mxu0 0.0
    %73 = vmatprep.subr.mxu0 0.0
    %74 = vmatpush1.msra.mxu0 0.0
    %75 = vmatprep.subr.mxu0 0.0
    %76 = vmatpush1.msra.mxu0 0.0
    %77 = vmatprep.subr.mxu0 0.0
    %78 = vmatpush1.msra.mxu0 0.0
    %79 = vmatprep.subr.mxu0 0.0
    %80 = vmatpush1.msra.mxu0 0.0
    %81 = vmatprep.subr.mxu0 0.0
    %82 = vmatpush1.msra.mxu0 0.0
    %83 = vmatprep.subr.mxu0 0.0
    %84 = vmatpush1.msra.mxu0 0.0
    %85 = vmatprep.subr.mxu0 0.0
    %86 = vmatpush1.msra.mxu0 0.0
    %87 = vmatprep.subr.mxu0 0.0
    %88 = vmatpush1.msra.mxu0 0.0
    %89 = vmatprep.subr.mxu0 0.0
    %90 = vmatpush1.msra.mxu0 0.0
    %91 = vmatprep.subr.mxu0 0.0
    %92 = vmatpush1.msra.mxu0 0.0
    %93 = vmatprep.subr.mxu0 0.0
    %94 = vmatpush1.msra.mxu0 0.0
    %95 = vmatprep.subr.mxu0 0.0
    %96 = vmatpush1.msra.mxu0 0.0
    %97 = vmatprep.subr.mxu0 0.0
    %98 = vmatpush1.msra.mxu0 0.0
    %99 = vmatprep.subr.mxu0 0.0
    %100 = vmatpush1.msra.mxu0 0.0
    %101 = vmatprep.subr.mxu0 0.0
    %102 = vmatpush1.msra.mxu0 0.0
    %103 = vmatprep.subr.mxu0 0.0
    %104 = vmatpush1.msra.mxu0 0.0
    %105 = vmatprep.subr.mxu0 0.0
    %106 = vmatpush1.msra.mxu0 0.0
    %107 = vmatprep.subr.mxu0 0.0
    %108 = vmatpush1.msra.mxu0 0.0
    %109 = vmatprep.subr.mxu0 0.0
    %110 = vmatpush1.msra.mxu0 0.0
    %111 = vmatprep.subr.mxu0 0.0
    %112 = vmatpush1.msra.mxu0 0.0
    %113 = vmatprep.subr.mxu0 0.0
    %114 = vmatpush1.msra.mxu0 0.0
    %115 = vmatprep.subr.mxu0 0.0
    %116 = vmatpush1.msra.mxu0 0.0
    %117 = vmatprep.subr.mxu0 0.0
    %118 = vmatpush1.msra.mxu0 0.0
    %119 = vmatprep.subr.mxu0 0.0
    %120 = vmatpush1.msra.mxu0 0.0
    %121 = vmatprep.subr.mxu0 0.0
    %122 = vmatpush1.msra.mxu0 0.0
    %123 = vmatprep.subr.mxu0 0.0
    %124 = vmatpush1.msra.mxu0 0.0
    %125 = vmatprep.subr.mxu0 0.0
    %126 = vmatpush1.msra.mxu0 0.0
    %127 = vmatprep.mubr.f32.mxu0 0.0
    %128 = vmatmul.mubr.f32.gmra.mrb[0].mxu0 %v58
    %v129 = vpop.f32.mrb[0].mxu0
    %v130 = vadd.f32 %v54, %v129
    %v131 = vpop.f32.mrb[0].mxu0
    %132 = vmatprep.mubr.f32.mxu0 0.0
    %133 = vmatmul.mubr.f32.gmra.mrb[0].mxu0 %v61
    %v134 = vpop.f32.mrb[0].mxu0
    %v135 = vadd.f32 %v54, %v134
    %v136 = vpop.f32.mrb[0].mxu0
    %137 = vdwg.mxu0
    %v138 = vmul.f32 %v130, 0.70710677
    %v139 = vmul.f32 %v135, 0.70710677
    %v140 = vand.u32 2147483647, %v138
    %v141 = vand.u32 2147483647, %v139
    %v142 = vmul.f32 %v140, 0.3275911
    %v143 = vmul.f32 %v141, 0.3275911
    %v144 = vadd.f32 %v142, 1.0
    %v145 = vadd.f32 %v143, 1.0
    %v146 = vrcp.pop %v144
    %v147 = vrcp.pop %v145
    %v148 = vmul.f32 %v144, %v146
    %v149 = vmul.f32 %v145, %v147
    %v150 = vsub.f32 2.0, %v148
    %v151 = vsub.f32 2.0, %v149
    %v152 = vmul.f32 %v146, %v150
    %v153 = vmul.f32 %v147, %v151
    %v154 = vmul.f32 %v152, 1.0614054
    %v155 = vmul.f32 %v153, 1.0614054
    %v156 = vadd.f32 %v154, -1.4531521
    %v157 = vadd.f32 %v155, -1.4531521
    %v158 = vmul.f32 %v152, %v156
    %v159 = vmul.f32 %v153, %v157
    %v160 = vadd.f32 %v158, 1.4214138
    %v161 = vadd.f32 %v159, 1.4214138
    %v162 = vmul.f32 %v152, %v160
    %v163 = vmul.f32 %v153, %v161
    %v164 = vadd.f32 %v162, -0.28449672
    %v165 = vadd.f32 %v163, -0.28449672
    %v166 = vmul.f32 %v152, %v164
    %v167 = vmul.f32 %v153, %v165
    %v168 = vadd.f32 %v166, 0.2548296
    %v169 = vadd.f32 %v167, 0.2548296
    %v170 = vmul.f32 %v152, %v168
    %v171 = vmul.f32 %v153, %v169
    %v172 = vmul.f32 %v140, %v140
    %v173 = vmul.f32 %v141, %v141
    %v174 = vsub.f32 0.0, %v172
    %v175 = vsub.f32 0.0, %v173
    %v176 = vmul.f32 %v174, 1.442695
    %v177 = vpow.pop %v176
    %v178 = vmul.f32 %v175, 1.442695
    %v179 = vpow.pop %v178
    %v180 = vmul.f32 %v170, %v177
    %v181 = vmul.f32 %v171, %v179
    %v182 = vsub.f32 1.0, %v180
    %v183 = vsub.f32 1.0, %v181
    %vm184 = vcmp.ge.f32.partialorder %v138, 0.0
    %vm185 = vcmp.ge.f32.partialorder %v139, 0.0
    %v186 = vsub.f32 0.0, %v182
    %v187 = vsub.f32 0.0, %v183
    %v188 = vsel %vm184, %v182, %v186
    %v189 = vsel %vm185, %v183, %v187
    %v190 = vmul.f32 %v130, 0.5
    %v191 = vmul.f32 %v135, 0.5
    %v192 = vadd.f32 %v188, 1.0
    %v193 = vadd.f32 %v189, 1.0
    %v194 = vmul.f32 %v190, %v192
    %v195 = vmul.f32 %v191, %v193
    %196 = vst [vmem:[#allocation7] sm:$0xff] %v194
    %197 = vst [vmem:[#allocation7 + $0x8] sm:$0xff] %v195
    // Predicated region
    $region22: #{tpu_custom_call.1} parent=1 // pred_check
      _
    $region23: #{tpu_custom_call.1} parent=1 // pred_check_branch
      %199 = sbr.rel (0) target = $region25
    $region24: #{tpu_custom_call.1} parent=1 // pred_region
      %s201 = ssub.s32 256, 256
      %202 = vsyncadd [#allocation4], %s201
      %s203 = sshll.u32 [#allocation7], 4
      %s204 = int_to_ptr.vmem [resolvable:$true] %s203
      %209 = dma.vmem_to_hbm [thread:$0]  %s204, 256, %s3, [#allocation4], 128, 128, 8
    $region25: #{tpu_custom_call.1} parent=1 // pred_fallthru
      _
    // Predicated region
    $region26: #{tpu_custom_call.1} parent=1 // pred_check
      _
    $region27: #{tpu_custom_call.1} parent=1 // pred_check_branch
      %211 = sbr.rel (0) target = $region29
    $region28: #{tpu_custom_call.1} parent=1 // pred_region
      %212 = dma.done [#allocation4], 256
    $region29: #{tpu_custom_call.1} parent=1 // pred_fallthru
      _
    %213 = vsyncpa [#allocation3], 1
    %214 = vsyncpa [#allocation6], 1
    %215 = vsyncpa [#allocation4], 1

</llo_original>
